<compile_context>
chip_gen: v5e
topology: v5e:2x2
jax: 0.10.0
libtpu: 0.0.40
codegen_flags: <defaults>
</compile_context>

<pallas_src>
import jax
import jax.numpy as jnp
from jax.experimental import pallas as pl
from jax.experimental.pallas import tpu as pltpu


def _lambda_silu_kernel(x_ref, o_ref):
    # SiLU: x * sigmoid(x);  sigmoid(x) = 0.5 * (tanh(0.5 * x) + 1)
    # -> transcendental goes to the EUP slot, leaving the VALU nearly free.
    xf = x_ref[...].astype(jnp.float32)
    sig = 0.5 * (jnp.tanh(0.5 * xf) + 1.0)
    o_ref[...] = (xf * sig).astype(o_ref.dtype)
    # TODO(synk): for bf16 streams on v6e/v7x (bf16-capable EUP) the tanh could
    # stay in bf16 to halve vreg pressure / double EUP rate; kept f32 here.


# Below this size pipelining cannot hide anything useful; run a single block
# with no grid (saves the ~0.35 us per-step pipeline machinery).  Larger
# inputs always take the grid path so DMA and compute overlap.
_SINGLE_BLOCK_BYTES = 192 * 1024


def _chip_params():
    """Returns (grid_block_bytes, tensorcores_per_chip) for this TPU generation.

    Block sizes are chosen so 2 input + 2 output double-buffers stay under the
    *default* scoped-VMEM limit of each generation (16 MiB v5e, 32 MiB
    v6e/v7x), so no vmem_limit_bytes override is required.
    """
    kind = ""
    try:
        kind = jax.devices()[0].device_kind.lower()
    except Exception:
        pass
    if "v7" in kind:
        # 64 MiB physical / 32 MiB scoped per TC, 2 TCs per chip.
        return 7 * 1024 * 1024, 2
    if "v6" in kind:
        # 128 MiB physical / 32 MiB scoped, 1 TC.
        return 7 * 1024 * 1024, 1
    # v5e and conservative fallback: 16 MiB scoped default.
    return 3 * 1024 * 1024, 1


def lambda_forward(x: jax.Array) -> jax.Array:
    """Applies Lambda(lambda x: x * sigmoid(x)) via a Pallas TPU kernel.

    Works for any shape; returns an array of the same shape/dtype.
    """
    orig_shape = x.shape
    n = x.size
    dtype = x.dtype
    itemsize = jnp.dtype(dtype).itemsize
    total_bytes = n * itemsize
    block_bytes, n_cores = _chip_params()
    # Minimum sublane multiple for this dtype: 8 (f32), 16 (bf16), 32 (i8/fp8).
    sublane = max(8, 32 // itemsize)

    # Widest lane-dense slab width (multiple of 128) that divides n exactly.
    lanes = 0
    for cand in (1024, 512, 256, 128):
        if n % cand == 0:
            lanes = cand
            break

    if lanes:
        rows = n // lanes
        x2d = x.reshape(rows, lanes)  # reshape of contiguous data is free

        if total_bytes <= _SINGLE_BLOCK_BYTES:
            # Tiny input: one block, no grid, no pipeline overhead.
            y2d = pl.pallas_call(
                _lambda_silu_kernel,
                out_shape=jax.ShapeDtypeStruct((rows, lanes), dtype),
            )(x2d)
        else:
            # Pipelined grid over rows with per-generation VMEM-budgeted blocks.
            block_rows = max(sublane, block_bytes // (lanes * itemsize))
            block_rows = min(block_rows, rows)
            block_rows = max(sublane, (block_rows // sublane) * sublane)
            steps = pl.cdiv(rows, block_rows)
            if n_cores > 1 and steps > 1 and steps % 2 == 1:
                # Even step count so the parallel row axis splits evenly across
                # both TensorCores on v7x (harmless elsewhere).
                target = steps + 1
                block_rows = pl.cdiv(rows, target)
                block_rows = max(
                    sublane, ((block_rows + sublane - 1) // sublane) * sublane)
                steps = pl.cdiv(rows, block_rows)

            y2d = pl.pallas_call(
                _lambda_silu_kernel,
                out_shape=jax.ShapeDtypeStruct((rows, lanes), dtype),
                grid_spec=pltpu.PrefetchScalarGridSpec(
                    num_scalar_prefetch=0,
                    grid=(steps,),
                    in_specs=[pl.BlockSpec((block_rows, lanes),
                                           lambda i: (i, 0))],
                    out_specs=pl.BlockSpec((block_rows, lanes),
                                           lambda i: (i, 0)),
                ),
                compiler_params=pltpu.CompilerParams(
                    dimension_semantics=("parallel",),
                ),
            )(x2d)
        return y2d.reshape(orig_shape)

    # ---- Ragged fallback: n is not a multiple of 128. ----
    # No host-side pad/slice round-trip: feed the flat array and let Pallas
    # mask the partial final block (elementwise op, so masked lanes are inert).
    x_flat = x.reshape(-1)
    if total_bytes <= _SINGLE_BLOCK_BYTES:
        y_flat = pl.pallas_call(
            _lambda_silu_kernel,
            out_shape=jax.ShapeDtypeStruct((n,), dtype),
        )(x_flat)
    else:
        # Modest ~1 MiB 1-D blocks (multiple of 1024 elements).  In this branch
        # n is large enough that n // 1024 >= 1, so block_len <= n always.
        block_len = 1024 * max(1, min((1024 * 1024 // itemsize) // 1024,
                                      n // 1024))
        y_flat = pl.pallas_call(
            _lambda_silu_kernel,
            out_shape=jax.ShapeDtypeStruct((n,), dtype),
            grid_spec=pltpu.PrefetchScalarGridSpec(
                num_scalar_prefetch=0,
                grid=(pl.cdiv(n, block_len),),
                in_specs=[pl.BlockSpec((block_len,), lambda i: (i,))],
                out_specs=pl.BlockSpec((block_len,), lambda i: (i,)),
            ),
            compiler_params=pltpu.CompilerParams(
                dimension_semantics=("parallel",),
            ),
        )(x_flat)
    return y_flat.reshape(orig_shape)


if __name__ == "__main__":
    key = jax.random.PRNGKey(0)
    # Small NCHW input consistent with a typical conv-net feature map.
    x = jax.random.normal(key, (2, 4, 16, 16), dtype=jnp.float32)

    y = lambda_forward(x)
    y = jax.block_until_ready(y)

    # Pure-JAX reference of the same Lambda func.
    y_ref = x * jax.nn.sigmoid(x)

    assert y.shape == x.shape and y.dtype == x.dtype
    assert jnp.allclose(y, y_ref, atol=1e-5, rtol=1e-5)
    print("KERNEL_OK")
</pallas_src>

<mosaic_0001>
module attributes {stable_mosaic.version = 11 : i64} {
  func.func @_lambda_silu_kernel(%arg0: memref<2x1024xf32, #tpu.memory_space<vmem>>, %arg1: memref<2x1024xf32, #tpu.memory_space<vmem>>) attributes {dimension_semantics = [], scalar_prefetch = 0 : i64, scratch_operands = 0 : i64, tpu.core_type = #tpu.core_type<tc>} {
    %c0 = arith.constant 0 : index
    %c0_0 = arith.constant 0 : index
    %0 = vector.load %arg0[%c0, %c0_0] : memref<2x1024xf32, #tpu.memory_space<vmem>>, vector<2x1024xf32>
    %cst = arith.constant 5.000000e-01 : f32
    %1 = vector.broadcast %cst : f32 to vector<2x1024xf32>
    %2 = arith.mulf %1, %0 : vector<2x1024xf32>
    %3 = math.tanh %2 : vector<2x1024xf32>
    %cst_1 = arith.constant 1.000000e+00 : f32
    %4 = vector.broadcast %cst_1 : f32 to vector<2x1024xf32>
    %5 = arith.addf %3, %4 : vector<2x1024xf32>
    %cst_2 = arith.constant 5.000000e-01 : f32
    %6 = vector.broadcast %cst_2 : f32 to vector<2x1024xf32>
    %7 = arith.mulf %6, %5 : vector<2x1024xf32>
    %8 = arith.mulf %0, %7 : vector<2x1024xf32>
    %c0_3 = arith.constant 0 : index
    %c0_4 = arith.constant 0 : index
    %9 = vector.load %arg1[%c0_3, %c0_4] : memref<2x1024xf32, #tpu.memory_space<vmem>>, vector<2x1024xf32>
    tpu.vector_store %arg1[%c0_3, %c0_4], %8 {strides = array<i32>} : memref<2x1024xf32, #tpu.memory_space<vmem>>, vector<2x1024xf32>,
    return
  }
}

</mosaic_0001>

<llo_original>
// kernel: tpu_custom_call.1
$region0: #{tpu_custom_call.1}
  #allocation0 [shape = 'u32[]', space=smem, size = 0x4, offset = 0x4, fixed_abs, tag = 'smem constant byte address 0x4 - core index']
  #allocation1 [shape = 'u32[72,128]{1,0:T(1,128)}', space=vmem, size = 0x9000, scoped, tag = 'internal scratch']
  %s0 = inlined_call_operand.hbm [shape: f32[2,1024], index: 0, kind: input, shape index: {}]
  %s1 = inlined_call_operand.hbm [shape: f32[2,1024], index: 1, kind: output, shape index: {}]
  %s2 = sld [smem:[#allocation0]]
  $region18: #{tpu_custom_call.1} parent=0
    _
  %s4 = ssub.s32 1, %s2
  %s5 = scalar_select 0, %s4, %s2
  $region1: #{tpu_custom_call.1} parent=0
    #allocation2 [shape = 'u8[8192]{0}', space=vmem, size = 0x2000, scoped, tag = 'input window, operand 0, single buffered']
    #allocation3 [shape = 's32[1]{0}', space=sflag, size = 0x4, scoped, tag = 'scoped memory for tpu_custom_call.1']
    #allocation4 [shape = 's32[1]{0}', space=sflag, size = 0x4, scoped, tag = 'scoped memory for tpu_custom_call.1']
    #allocation5 [shape = 'u8[8192]{0}', space=vmem, size = 0x2000, scoped, tag = 'output window, operand 0, single buffered']
    %6 = vsyncpa [#allocation3], 0
    %7 = vsyncpa [#allocation4], 0
    // Predicated region
    $region2: #{tpu_custom_call.1} parent=1 // pred_check
      _
    $region3: #{tpu_custom_call.1} parent=1 // pred_check_branch
      %9 = sbr.rel (0) target = $region5
    $region4: #{tpu_custom_call.1} parent=1 // pred_region
      %11 = vsyncadd [#allocation3], 0
      %s13 = sshll.u32 %s0, 4
      %s14 = int_to_ptr.hbm [resolvable:$true] %s13
      %s15 = sshll.u32 [#allocation2], 4
      %s16 = int_to_ptr.vmem [resolvable:$true] %s15
      %18 = dma.hbm_to_vmem [thread:$0]  %s14, 256, %s16, [#allocation3]
    $region5: #{tpu_custom_call.1} parent=1 // pred_fallthru
      _
    // Predicated region
    $region6: #{tpu_custom_call.1} parent=1 // pred_check
      _
    $region7: #{tpu_custom_call.1} parent=1 // pred_check_branch
      %20 = sbr.rel (0) target = $region9
    $region8: #{tpu_custom_call.1} parent=1 // pred_region
      %22 = dma.done [#allocation3], 256
    $region9: #{tpu_custom_call.1} parent=1 // pred_fallthru
      _
    %v23 = vld [vmem:[#allocation2] sm:$0xff]
    %v24 = vld [vmem:[#allocation2 + $0x8] sm:$0xff]
    %v25 = vmul.f32 %v23, 0.5
    %v26 = vmul.f32 %v24, 0.5
    %v27 = vtanh.pop %v25
    %v28 = vtanh.pop %v26
    %v29 = vadd.f32 %v27, 1.0
    %v30 = vadd.f32 %v28, 1.0
    %v31 = vmul.f32 %v29, 0.5
    %v32 = vmul.f32 %v30, 0.5
    %v33 = vmul.f32 %v23, %v31
    %v34 = vmul.f32 %v24, %v32
    %35 = vst [vmem:[#allocation5] sm:$0xff] %v33
    %36 = vst [vmem:[#allocation5 + $0x8] sm:$0xff] %v34
    // Predicated region
    $region10: #{tpu_custom_call.1} parent=1 // pred_check
      _
    $region11: #{tpu_custom_call.1} parent=1 // pred_check_branch
      %38 = sbr.rel (0) target = $region13
    $region12: #{tpu_custom_call.1} parent=1 // pred_region
      %40 = vsyncadd [#allocation4], 0
      %s42 = sshll.u32 [#allocation5], 4
      %s43 = int_to_ptr.vmem [resolvable:$true] %s42
      %s44 = sshll.u32 %s1, 4
      %s45 = int_to_ptr.hbm [resolvable:$true] %s44
      %47 = dma.vmem_to_hbm [thread:$0]  %s43, 256, %s45, [#allocation4]
    $region13: #{tpu_custom_call.1} parent=1 // pred_fallthru
      _
    // Predicated region
    $region14: #{tpu_custom_call.1} parent=1 // pred_check
      _
    $region15: #{tpu_custom_call.1} parent=1 // pred_check_branch
      %49 = sbr.rel (0) target = $region17
    $region16: #{tpu_custom_call.1} parent=1 // pred_region
      %51 = dma.done [#allocation4], 256
    $region17: #{tpu_custom_call.1} parent=1 // pred_fallthru
      _
    %52 = vsyncpa [#allocation3], 1
    %53 = vsyncpa [#allocation4], 1

</llo_original>
